<compile_context>
chip_gen: v5e
topology: v5e:2x2
jax: 0.10.0
libtpu: 0.0.40
codegen_flags: <defaults>
</compile_context>

<pallas_src>
from functools import partial

import jax
import jax.numpy as jnp
from jax.experimental import pallas as pl
from jax.experimental.pallas import tpu as pltpu

# ---- mini_imagenet configuration from Net.__init__ ----
NUM_FEATURES = 512
N_CLASS = 100
NC_BASE = 60
NC_PER_TASK = 5
N_LAYERS = 2          # args.n_layers
N_HIDDENS = 32        # args.n_hiddens

LANE = 128
MAX_TILE_HW = 2048    # lane-dim tile for the streaming GAP reduction
MAX_TILE_N = 64       # batch tile (multiple of 8)


def _round_up(a, b):
    return ((a + b - 1) // b) * b


def compute_offsets(task):
    # Exact port of Net.compute_offsets (returns Python ints, as in the module).
    if task == 0:
        offset1 = 0
    else:
        offset1 = (task - 1) * NC_PER_TASK + NC_BASE
    offset2 = task * NC_PER_TASK + NC_BASE
    return int(offset1), int(offset2)


def _net_forward_kernel(inv_hw,
                        x_ref, sel_ref, projt_ref,
                        w0_ref, b0_ref, w1_ref, b1_ref, w2_ref, b2_ref,
                        out_ref, acc_ref):
    j = pl.program_id(1)

    @pl.when(j == 0)
    def _():
        acc_ref[...] = jnp.zeros_like(acc_ref)

    # ---- hot loop: HBM-bound streaming GAP partial sum -------------------
    # x block is (TILE_N*C, TILE_HW); per-row sum over lanes -> (TILE_N*C, 1).
    acc_ref[...] += jnp.sum(x_ref[...], axis=-1, keepdims=True)

    # ---- finalize: encoder projection + MLP + task-sliced logits ---------
    @pl.when(j == pl.num_programs(1) - 1)
    def _():
        # feat = (1/HW) * unflatten(acc, (TILE_N, C)) @ proj, expressed as
        # sel @ (acc * proj_tiled) to keep everything in MXU/VPU-native shapes
        # (no in-kernel reshape of a tiny, oddly-shaped array).
        weighted = acc_ref[...] * projt_ref[...]                      # (TN*C, 512)
        feat = jnp.dot(sel_ref[...], weighted,
                       preferred_element_type=jnp.float32) * inv_hw   # (TN, 512)

        h = jnp.dot(feat, w0_ref[...], preferred_element_type=jnp.float32) + b0_ref[...]
        h = jnp.maximum(h, 0.0)
        h = jnp.dot(h, w1_ref[...], preferred_element_type=jnp.float32) + b1_ref[...]
        h = jnp.maximum(h, 0.0)
        out = jnp.dot(h, w2_ref[...], preferred_element_type=jnp.float32) + b2_ref[...]
        out_ref[...] = out                                            # lane-dense store


def net_forward(x, t, params):
    """x: (N, C, H, W) float32 NCHW image batch. Returns (N, offset2 - offset1) logits."""
    N, C, H, W = x.shape
    HW = H * W
    offset1, offset2 = compute_offsets(t)
    n_task = offset2 - offset1

    # ---- tiling ----------------------------------------------------------
    TILE_N = max(8, min(MAX_TILE_N, _round_up(N, 8)))
    N_pad = _round_up(N, TILE_N)
    TILE_HW = _round_up(HW, LANE) if HW <= MAX_TILE_HW else MAX_TILE_HW
    HW_pad = _round_up(HW, TILE_HW)

    # ---- dense 2-D input layout (free reshape; zero-pad batch + HW) ------
    x3d = x.reshape(N, C, HW).astype(jnp.float32)
    if N_pad != N or HW_pad != HW:
        x3d = jnp.pad(x3d, ((0, N_pad - N), (0, 0), (0, HW_pad - HW)))
    x2d = x3d.reshape(N_pad * C, HW_pad)

    # ---- host-side parameter prep (lane-padded, task-sliced) -------------
    HPAD = _round_up(N_HIDDENS, LANE)      # 128
    OUT_PAD = _round_up(n_task, LANE)      # 128

    def pad2(a, rows, cols):
        return jnp.pad(a, ((0, rows - a.shape[0]), (0, cols - a.shape[1])))

    w0p = pad2(params["w0"], NUM_FEATURES, HPAD)
    b0p = pad2(params["b0"], 1, HPAD)
    w1p = pad2(params["w1"], HPAD, HPAD)
    b1p = pad2(params["b1"], 1, HPAD)
    w2p = pad2(params["w2"][:, offset1:offset2], HPAD, OUT_PAD)
    b2p = pad2(params["b2"][:, offset1:offset2], 1, OUT_PAD)

    # sel[n, n*C + c] = 1  -> "unflatten + sum over channels" as a tiny matmul
    sel = jnp.repeat(jnp.eye(TILE_N, dtype=jnp.float32), C, axis=1)   # (TN, TN*C)
    projt = jnp.tile(params["proj"], (TILE_N, 1))                     # (TN*C, 512)

    grid = (N_pad // TILE_N, HW_pad // TILE_HW)
    kernel = partial(_net_forward_kernel, float(1.0 / HW))

    full = pl.pallas_call(
        kernel,
        out_shape=jax.ShapeDtypeStruct((N_pad, OUT_PAD), jnp.float32),
        grid_spec=pltpu.PrefetchScalarGridSpec(
            num_scalar_prefetch=0,
            grid=grid,
            in_specs=[
                pl.BlockSpec((TILE_N * C, TILE_HW), lambda i, j: (i, j)),       # x
                pl.BlockSpec((TILE_N, TILE_N * C), lambda i, j: (0, 0)),        # sel
                pl.BlockSpec((TILE_N * C, NUM_FEATURES), lambda i, j: (0, 0)),  # proj tiled
                pl.BlockSpec((NUM_FEATURES, HPAD), lambda i, j: (0, 0)),        # w0
                pl.BlockSpec((1, HPAD), lambda i, j: (0, 0)),                   # b0
                pl.BlockSpec((HPAD, HPAD), lambda i, j: (0, 0)),                # w1
                pl.BlockSpec((1, HPAD), lambda i, j: (0, 0)),                   # b1
                pl.BlockSpec((HPAD, OUT_PAD), lambda i, j: (0, 0)),             # w2 (task cols)
                pl.BlockSpec((1, OUT_PAD), lambda i, j: (0, 0)),                # b2 (task cols)
            ],
            out_specs=pl.BlockSpec((TILE_N, OUT_PAD), lambda i, j: (i, 0)),
            scratch_shapes=[pltpu.VMEM((TILE_N * C, 1), jnp.float32)],
        ),
        compiler_params=pltpu.CompilerParams(
            dimension_semantics=("parallel", "arbitrary")),
    )(x2d, sel, projt, w0p, b0p, w1p, b1p, w2p, b2p)

    # Net.forward returns only the current task's slice.
    return full[:N, :n_task]


def init_params(key, in_channels):
    # Deterministic synthetic parameters (this is not a checkpoint load).
    ks = jax.random.split(key, 8)
    scale = 0.05
    f32 = jnp.float32
    return {
        # encoder stand-in projection: (C, 512)
        "proj": scale * jax.random.normal(ks[0], (in_channels, NUM_FEATURES), f32),
        # MLP([512, nh, nh, n_class]); weights stored (in, out), biases (1, out)
        "w0": scale * jax.random.normal(ks[1], (NUM_FEATURES, N_HIDDENS), f32),
        "b0": scale * jax.random.normal(ks[2], (1, N_HIDDENS), f32),
        "w1": scale * jax.random.normal(ks[3], (N_HIDDENS, N_HIDDENS), f32),
        "b1": scale * jax.random.normal(ks[4], (1, N_HIDDENS), f32),
        "w2": scale * jax.random.normal(ks[5], (N_HIDDENS, N_CLASS), f32),
        "b2": scale * jax.random.normal(ks[6], (1, N_CLASS), f32),
    }


def ref_forward(x, t, params):
    # Pure-JAX reference (same stand-in encoder + MLP stack).
    o1, o2 = compute_offsets(t)
    N, C, H, W = x.shape
    feat = jnp.mean(x.reshape(N, C, H * W), axis=-1) @ params["proj"]
    h = jnp.maximum(feat @ params["w0"] + params["b0"], 0.0)
    h = jnp.maximum(h @ params["w1"] + params["b1"], 0.0)
    logits = h @ params["w2"] + params["b2"]
    return logits[:, o1:o2]


if __name__ == "__main__":
    key = jax.random.PRNGKey(0)
    k_x, k_p = jax.random.split(key)

    # Small NCHW image batch (PyTorch uses (N, 3, 224, 224); scaled down here).
    x = jax.random.normal(k_x, (2, 3, 16, 16), jnp.float32)
    params = init_params(k_p, in_channels=3)

    t = 1  # task id -> offsets (60, 65) -> output shape (2, 5)
    out = net_forward(x, t, params)
    out = jax.block_until_ready(out)

    o1, o2 = compute_offsets(t)
    assert out.shape == (2, o2 - o1), out.shape
    assert bool(jnp.all(jnp.isfinite(out)))

    ref = ref_forward(x, t, params)
    max_err = float(jnp.max(jnp.abs(out - ref)))
    assert max_err < 1e-2, f"max_err={max_err}"

    print("KERNEL_OK")
</pallas_src>

<mosaic_0001>
module attributes {stable_mosaic.version = 11 : i64} {
  func.func @_net_forward_kernel(%arg0: i32, %arg1: i32, %arg2: memref<24x256xf32, #tpu.memory_space<vmem>>, %arg3: memref<8x24xf32, #tpu.memory_space<vmem>>, %arg4: memref<24x512xf32, #tpu.memory_space<vmem>>, %arg5: memref<512x128xf32, #tpu.memory_space<vmem>>, %arg6: memref<1x128xf32, #tpu.memory_space<vmem>>, %arg7: memref<128x128xf32, #tpu.memory_space<vmem>>, %arg8: memref<1x128xf32, #tpu.memory_space<vmem>>, %arg9: memref<128x128xf32, #tpu.memory_space<vmem>>, %arg10: memref<1x128xf32, #tpu.memory_space<vmem>>, %arg11: memref<8x128xf32, #tpu.memory_space<vmem>>, %arg12: memref<24x1xf32, #tpu.memory_space<vmem>>) attributes {dimension_semantics = [#tpu.dimension_semantics<parallel>, #tpu.dimension_semantics<arbitrary>], iteration_bounds = array<i64: 1, 1>, scalar_prefetch = 0 : i64, scratch_operands = 1 : i64, tpu.core_type = #tpu.core_type<tc>, window_params = [{transform_indices = @transform_0, window_bounds = array<i64: 24, 256>}, {pipeline_mode = #tpu.pipeline_mode<synchronous>, transform_indices = @transform_1, window_bounds = array<i64: 8, 24>}, {pipeline_mode = #tpu.pipeline_mode<synchronous>, transform_indices = @transform_2, window_bounds = array<i64: 24, 512>}, {pipeline_mode = #tpu.pipeline_mode<synchronous>, transform_indices = @transform_3, window_bounds = array<i64: 512, 128>}, {pipeline_mode = #tpu.pipeline_mode<synchronous>, transform_indices = @transform_4, window_bounds = array<i64: 1, 128>}, {pipeline_mode = #tpu.pipeline_mode<synchronous>, transform_indices = @transform_5, window_bounds = array<i64: 128, 128>}, {pipeline_mode = #tpu.pipeline_mode<synchronous>, transform_indices = @transform_6, window_bounds = array<i64: 1, 128>}, {pipeline_mode = #tpu.pipeline_mode<synchronous>, transform_indices = @transform_7, window_bounds = array<i64: 128, 128>}, {pipeline_mode = #tpu.pipeline_mode<synchronous>, transform_indices = @transform_8, window_bounds = array<i64: 1, 128>}, {transform_indices = @transform_9, window_bounds = array<i64: 8, 128>}]} {
    %c0_i32 = arith.constant 0 : i32
    %0 = arith.cmpi eq, %arg1, %c0_i32 : i32
    %1 = arith.extui %0 : i1 to i32
    %c0_i32_0 = arith.constant 0 : i32
    %2 = arith.cmpi ne, %1, %c0_i32_0 : i32
    scf.if %2 {
      %cst_8 = arith.constant 0.000000e+00 : f32
      %12 = vector.broadcast %cst_8 : f32 to vector<24x1xf32>
      %c0_9 = arith.constant 0 : index
      %c0_10 = arith.constant 0 : index
      %13 = vector.load %arg12[%c0_9, %c0_10] : memref<24x1xf32, #tpu.memory_space<vmem>>, vector<24x1xf32>
      tpu.vector_store %arg12[%c0_9, %c0_10], %12 {strides = array<i32>} : memref<24x1xf32, #tpu.memory_space<vmem>>, vector<24x1xf32>,
    } else {
    }
    %c0 = arith.constant 0 : index
    %c0_1 = arith.constant 0 : index
    %3 = vector.load %arg12[%c0, %c0_1] : memref<24x1xf32, #tpu.memory_space<vmem>>, vector<24x1xf32>
    %c0_2 = arith.constant 0 : index
    %c0_3 = arith.constant 0 : index
    %4 = vector.load %arg2[%c0_2, %c0_3] : memref<24x256xf32, #tpu.memory_space<vmem>>, vector<24x256xf32>
    %cst = arith.constant dense<0.000000e+00> : vector<24xf32>
    %5 = vector.multi_reduction <add>, %4, %cst [1] : vector<24x256xf32> to vector<24xf32>
    %6 = vector.shape_cast %5 : vector<24xf32> to vector<24x1xf32>
    %7 = arith.addf %3, %6 : vector<24x1xf32>
    %c0_4 = arith.constant 0 : index
    %c0_5 = arith.constant 0 : index
    %8 = vector.load %arg12[%c0_4, %c0_5] : memref<24x1xf32, #tpu.memory_space<vmem>>, vector<24x1xf32>
    tpu.vector_store %arg12[%c0_4, %c0_5], %7 {strides = array<i32>} : memref<24x1xf32, #tpu.memory_space<vmem>>, vector<24x1xf32>,
    %c0_i32_6 = arith.constant 0 : i32
    %9 = arith.cmpi eq, %arg1, %c0_i32_6 : i32
    %10 = arith.extui %9 : i1 to i32
    %c0_i32_7 = arith.constant 0 : i32
    %11 = arith.cmpi ne, %10, %c0_i32_7 : i32
    scf.if %11 {
      %c0_8 = arith.constant 0 : index
      %c0_9 = arith.constant 0 : index
      %12 = vector.load %arg12[%c0_8, %c0_9] : memref<24x1xf32, #tpu.memory_space<vmem>>, vector<24x1xf32>
      %c0_10 = arith.constant 0 : index
      %c0_11 = arith.constant 0 : index
      %13 = vector.load %arg4[%c0_10, %c0_11] : memref<24x512xf32, #tpu.memory_space<vmem>>, vector<24x512xf32>
      %14 = vector.broadcast %12 : vector<24x1xf32> to vector<24x512xf32>
      %15 = arith.mulf %14, %13 : vector<24x512xf32>
      %c0_12 = arith.constant 0 : index
      %c0_13 = arith.constant 0 : index
      %16 = vector.load %arg3[%c0_12, %c0_13] : memref<8x24xf32, #tpu.memory_space<vmem>>, vector<8x24xf32>
      %cst_14 = arith.constant dense<0.000000e+00> : vector<8x512xf32>
      %17 = tpu.matmul %16, %15, %cst_14 {dimension_numbers = #tpu.dot_dimension_numbers<[1], [0], [0], [1], [0, 0, 1, 1], [], []>} : vector<8x24xf32>, vector<24x512xf32>, vector<8x512xf32> -> vector<8x512xf32>
      %cst_15 = arith.constant 3.906250e-03 : f32
      %18 = vector.broadcast %cst_15 : f32 to vector<8x512xf32>
      %19 = arith.mulf %17, %18 : vector<8x512xf32>
      %c0_16 = arith.constant 0 : index
      %c0_17 = arith.constant 0 : index
      %20 = vector.load %arg5[%c0_16, %c0_17] : memref<512x128xf32, #tpu.memory_space<vmem>>, vector<512x128xf32>
      %cst_18 = arith.constant dense<0.000000e+00> : vector<8x128xf32>
      %21 = tpu.matmul %19, %20, %cst_18 {dimension_numbers = #tpu.dot_dimension_numbers<[1], [0], [0], [1], [0, 0, 1, 1], [], []>} : vector<8x512xf32>, vector<512x128xf32>, vector<8x128xf32> -> vector<8x128xf32>
      %c0_19 = arith.constant 0 : index
      %c0_20 = arith.constant 0 : index
      %22 = vector.load %arg6[%c0_19, %c0_20] : memref<1x128xf32, #tpu.memory_space<vmem>>, vector<1x128xf32>
      %23 = vector.broadcast %22 : vector<1x128xf32> to vector<8x128xf32>
      %24 = arith.addf %21, %23 : vector<8x128xf32>
      %cst_21 = arith.constant 0.000000e+00 : f32
      %25 = vector.broadcast %cst_21 : f32 to vector<8x128xf32>
      %26 = arith.maximumf %24, %25 : vector<8x128xf32>
      %c0_22 = arith.constant 0 : index
      %c0_23 = arith.constant 0 : index
      %27 = vector.load %arg7[%c0_22, %c0_23] : memref<128x128xf32, #tpu.memory_space<vmem>>, vector<128x128xf32>
      %cst_24 = arith.constant dense<0.000000e+00> : vector<8x128xf32>
      %28 = tpu.matmul %26, %27, %cst_24 {dimension_numbers = #tpu.dot_dimension_numbers<[1], [0], [0], [1], [0, 0, 1, 1], [], []>} : vector<8x128xf32>, vector<128x128xf32>, vector<8x128xf32> -> vector<8x128xf32>
      %c0_25 = arith.constant 0 : index
      %c0_26 = arith.constant 0 : index
      %29 = vector.load %arg8[%c0_25, %c0_26] : memref<1x128xf32, #tpu.memory_space<vmem>>, vector<1x128xf32>
      %30 = vector.broadcast %29 : vector<1x128xf32> to vector<8x128xf32>
      %31 = arith.addf %28, %30 : vector<8x128xf32>
      %cst_27 = arith.constant 0.000000e+00 : f32
      %32 = vector.broadcast %cst_27 : f32 to vector<8x128xf32>
      %33 = arith.maximumf %31, %32 : vector<8x128xf32>
      %c0_28 = arith.constant 0 : index
      %c0_29 = arith.constant 0 : index
      %34 = vector.load %arg9[%c0_28, %c0_29] : memref<128x128xf32, #tpu.memory_space<vmem>>, vector<128x128xf32>
      %cst_30 = arith.constant dense<0.000000e+00> : vector<8x128xf32>
      %35 = tpu.matmul %33, %34, %cst_30 {dimension_numbers = #tpu.dot_dimension_numbers<[1], [0], [0], [1], [0, 0, 1, 1], [], []>} : vector<8x128xf32>, vector<128x128xf32>, vector<8x128xf32> -> vector<8x128xf32>
      %c0_31 = arith.constant 0 : index
      %c0_32 = arith.constant 0 : index
      %36 = vector.load %arg10[%c0_31, %c0_32] : memref<1x128xf32, #tpu.memory_space<vmem>>, vector<1x128xf32>
      %37 = vector.broadcast %36 : vector<1x128xf32> to vector<8x128xf32>
      %38 = arith.addf %35, %37 : vector<8x128xf32>
      %c0_33 = arith.constant 0 : index
      %c0_34 = arith.constant 0 : index
      %39 = vector.load %arg11[%c0_33, %c0_34] : memref<8x128xf32, #tpu.memory_space<vmem>>, vector<8x128xf32>
      tpu.vector_store %arg11[%c0_33, %c0_34], %38 {strides = array<i32>} : memref<8x128xf32, #tpu.memory_space<vmem>>, vector<8x128xf32>,
    } else {
    }
    return
  }
  func.func @transform_0(%arg0: i32, %arg1: i32) -> (i32, i32) {
    %c0_i32 = arith.constant 0 : i32
    return %arg0, %arg1 : i32, i32
  }
  func.func @transform_1(%arg0: i32, %arg1: i32) -> (i32, i32) {
    %c0_i32 = arith.constant 0 : i32
    %c0_i32_0 = arith.constant 0 : i32
    %c0_i32_1 = arith.constant 0 : i32
    return %c0_i32, %c0_i32_0 : i32, i32
  }
  func.func @transform_2(%arg0: i32, %arg1: i32) -> (i32, i32) {
    %c0_i32 = arith.constant 0 : i32
    %c0_i32_0 = arith.constant 0 : i32
    %c0_i32_1 = arith.constant 0 : i32
    return %c0_i32, %c0_i32_0 : i32, i32
  }
  func.func @transform_3(%arg0: i32, %arg1: i32) -> (i32, i32) {
    %c0_i32 = arith.constant 0 : i32
    %c0_i32_0 = arith.constant 0 : i32
    %c0_i32_1 = arith.constant 0 : i32
    return %c0_i32, %c0_i32_0 : i32, i32
  }
  func.func @transform_4(%arg0: i32, %arg1: i32) -> (i32, i32) {
    %c0_i32 = arith.constant 0 : i32
    %c0_i32_0 = arith.constant 0 : i32
    %c0_i32_1 = arith.constant 0 : i32
    return %c0_i32, %c0_i32_0 : i32, i32
  }
  func.func @transform_5(%arg0: i32, %arg1: i32) -> (i32, i32) {
    %c0_i32 = arith.constant 0 : i32
    %c0_i32_0 = arith.constant 0 : i32
    %c0_i32_1 = arith.constant 0 : i32
    return %c0_i32, %c0_i32_0 : i32, i32
  }
  func.func @transform_6(%arg0: i32, %arg1: i32) -> (i32, i32) {
    %c0_i32 = arith.constant 0 : i32
    %c0_i32_0 = arith.constant 0 : i32
    %c0_i32_1 = arith.constant 0 : i32
    return %c0_i32, %c0_i32_0 : i32, i32
  }
  func.func @transform_7(%arg0: i32, %arg1: i32) -> (i32, i32) {
    %c0_i32 = arith.constant 0 : i32
    %c0_i32_0 = arith.constant 0 : i32
    %c0_i32_1 = arith.constant 0 : i32
    return %c0_i32, %c0_i32_0 : i32, i32
  }
  func.func @transform_8(%arg0: i32, %arg1: i32) -> (i32, i32) {
    %c0_i32 = arith.constant 0 : i32
    %c0_i32_0 = arith.constant 0 : i32
    %c0_i32_1 = arith.constant 0 : i32
    return %c0_i32, %c0_i32_0 : i32, i32
  }
  func.func @transform_9(%arg0: i32, %arg1: i32) -> (i32, i32) {
    %c0_i32 = arith.constant 0 : i32
    %c0_i32_0 = arith.constant 0 : i32
    return %arg0, %c0_i32 : i32, i32
  }
}

</mosaic_0001>

<llo_original>
// kernel: tpu_custom_call.1
$region0: #{tpu_custom_call.1}
  #allocation0 [shape = 'u32[]', space=smem, size = 0x4, offset = 0x4, fixed_abs, tag = 'smem constant byte address 0x4 - core index']
  #allocation1 [shape = 'u32[72,128]{1,0:T(1,128)}', space=vmem, size = 0x9000, scoped, tag = 'internal scratch']
  #allocation2 [shape = 'f32[24,1]{1,0:T(8,128)}', space=vmem, size = 0x3000, scoped, tag = 'scratch operand']
  %s0 = inlined_call_operand.hbm [shape: f32[24,256], index: 0, kind: input, shape index: {}]
  %s1 = inlined_call_operand.hbm [shape: f32[8,24], index: 1, kind: input, shape index: {}]
  %s2 = inlined_call_operand.hbm [shape: f32[24,512], index: 2, kind: input, shape index: {}]
  %s3 = inlined_call_operand.hbm [shape: f32[512,128], index: 3, kind: input, shape index: {}]
  %s4 = inlined_call_operand.vmem [shape: f32[1,128], index: 4, kind: input, shape index: {}]
  %s5 = inlined_call_operand.hbm [shape: f32[128,128], index: 5, kind: input, shape index: {}]
  %s6 = inlined_call_operand.vmem [shape: f32[1,128], index: 6, kind: input, shape index: {}]
  %s7 = inlined_call_operand.hbm [shape: f32[128,128], index: 7, kind: input, shape index: {}]
  %s8 = inlined_call_operand.vmem [shape: f32[1,128], index: 8, kind: input, shape index: {}]
  %s9 = inlined_call_operand.hbm [shape: f32[8,128], index: 9, kind: output, shape index: {}]
  %s10 = sld [smem:[#allocation0]]
  $region78: #{tpu_custom_call.1} parent=0
    _
  %s12 = ssub.s32 1, %s10
  %s13 = scalar_select 0, %s12, %s10
  $region1: #{tpu_custom_call.1} parent=0
    #allocation3 [shape = 'u8[24576]{0}', space=vmem, size = 0x6000, scoped, tag = 'input window, operand 0, single buffered']
    #allocation4 [shape = 's32[1]{0}', space=sflag, size = 0x4, scoped, tag = 'scoped memory for tpu_custom_call.1']
    #allocation5 [shape = 's32[1]{0}', space=sflag, size = 0x4, scoped, tag = 'scoped memory for tpu_custom_call.1']
    #allocation6 [shape = 'u8[4096]{0}', space=vmem, size = 0x1000, scoped, tag = 'input window, operand 1, single buffered']
    #allocation7 [shape = 's32[1]{0}', space=sflag, size = 0x4, scoped, tag = 'scoped memory for tpu_custom_call.1']
    #allocation8 [shape = 'u8[49152]{0}', space=vmem, size = 0xc000, scoped, tag = 'input window, operand 2, single buffered']
    #allocation9 [shape = 'u8[262144]{0}', space=vmem, size = 0x40000, scoped, tag = 'input window, operand 3, single buffered']
    #allocation10 [shape = 's32[1]{0}', space=sflag, size = 0x4, scoped, tag = 'scoped memory for tpu_custom_call.1']
    #allocation11 [shape = 'u8[65536]{0}', space=vmem, size = 0x10000, scoped, tag = 'input window, operand 5, single buffered']
    #allocation12 [shape = 'u8[65536]{0}', space=vmem, size = 0x10000, scoped, tag = 'input window, operand 7, single buffered']
    #allocation13 [shape = 's32[1]{0}', space=sflag, size = 0x4, scoped, tag = 'scoped memory for tpu_custom_call.1']
    #allocation14 [shape = 'u8[4096]{0}', space=vmem, size = 0x1000, scoped, tag = 'output window, operand 0, single buffered']
    %14 = vsyncpa [#allocation4], 0
    %15 = vsyncpa [#allocation7], 0
    %16 = vsyncpa [#allocation10], 0
    %17 = vsyncpa [#allocation13], 0
    %18 = vsyncpa [#allocation5], 0
    // Predicated region
    $region2: #{tpu_custom_call.1} parent=1 // pred_check
      _
    $region3: #{tpu_custom_call.1} parent=1 // pred_check_branch
      %20 = sbr.rel (0) target = $region5
    $region4: #{tpu_custom_call.1} parent=1 // pred_region
      %22 = vsyncadd [#allocation4], 0
      %s23 = sshll.u32 %s0, 4
      %s24 = int_to_ptr.hbm [resolvable:$true] %s23
      %s25 = sshll.u32 [#allocation3], 4
      %s26 = int_to_ptr.vmem [resolvable:$true] %s25
      %31 = dma.hbm_to_vmem [thread:$0]  %s24, 768, %s26, [#allocation4], 256, 256, 16
    $region5: #{tpu_custom_call.1} parent=1 // pred_fallthru
      _
    // Predicated region
    $region6: #{tpu_custom_call.1} parent=1 // pred_check
      _
    $region7: #{tpu_custom_call.1} parent=1 // pred_check_branch
      %33 = sbr.rel (0) target = $region9
    $region8: #{tpu_custom_call.1} parent=1 // pred_region
      %35 = vsyncadd [#allocation7], 0
      %s37 = sshll.u32 %s1, 4
      %s38 = int_to_ptr.hbm [resolvable:$true] %s37
      %s39 = sshll.u32 [#allocation6], 4
      %s40 = int_to_ptr.vmem [resolvable:$true] %s39
      %42 = dma.hbm_to_vmem [thread:$0]  %s38, 128, %s40, [#allocation7]
    $region9: #{tpu_custom_call.1} parent=1 // pred_fallthru
      _
    // Predicated region
    $region10: #{tpu_custom_call.1} parent=1 // pred_check
      _
    $region11: #{tpu_custom_call.1} parent=1 // pred_check_branch
      %44 = sbr.rel (0) target = $region13
    $region12: #{tpu_custom_call.1} parent=1 // pred_region
      %46 = vsyncadd [#allocation7], 0
      %s47 = sshll.u32 %s2, 4
      %s48 = int_to_ptr.hbm [resolvable:$true] %s47
      %s49 = sshll.u32 [#allocation8], 4
      %s50 = int_to_ptr.vmem [resolvable:$true] %s49
      %55 = dma.hbm_to_vmem [thread:$0]  %s48, 1536, %s50, [#allocation7], 512, 512, 32
    $region13: #{tpu_custom_call.1} parent=1 // pred_fallthru
      _
    // Predicated region
    $region14: #{tpu_custom_call.1} parent=1 // pred_check
      _
    $region15: #{tpu_custom_call.1} parent=1 // pred_check_branch
      %57 = sbr.rel (0) target = $region17
    $region16: #{tpu_custom_call.1} parent=1 // pred_region
      %59 = vsyncadd [#allocation10], 0
      %s60 = sshll.u32 %s3, 4
      %s61 = int_to_ptr.hbm [resolvable:$true] %s60
      %s62 = sshll.u32 [#allocation9], 4
      %s63 = int_to_ptr.vmem [resolvable:$true] %s62
      %68 = dma.hbm_to_vmem [thread:$0]  %s61, 8192, %s63, [#allocation10], 128, 128, 8
    $region17: #{tpu_custom_call.1} parent=1 // pred_fallthru
      _
    // Predicated region
    $region18: #{tpu_custom_call.1} parent=1 // pred_check
      _
    $region19: #{tpu_custom_call.1} parent=1 // pred_check_branch
      %70 = sbr.rel (0) target = $region21
    $region20: #{tpu_custom_call.1} parent=1 // pred_region
      _
    $region21: #{tpu_custom_call.1} parent=1 // pred_fallthru
      _
    // Predicated region
    $region22: #{tpu_custom_call.1} parent=1 // pred_check
      _
    $region23: #{tpu_custom_call.1} parent=1 // pred_check_branch
      %72 = sbr.rel (0) target = $region25
    $region24: #{tpu_custom_call.1} parent=1 // pred_region
      %74 = vsyncadd [#allocation10], 0
      %s75 = sshll.u32 %s5, 4
      %s76 = int_to_ptr.hbm [resolvable:$true] %s75
      %s77 = sshll.u32 [#allocation11], 4
      %s78 = int_to_ptr.vmem [resolvable:$true] %s77
      %83 = dma.hbm_to_vmem [thread:$0]  %s76, 2048, %s78, [#allocation10], 128, 128, 8
    $region25: #{tpu_custom_call.1} parent=1 // pred_fallthru
      _
    // Predicated region
    $region26: #{tpu_custom_call.1} parent=1 // pred_check
      _
    $region27: #{tpu_custom_call.1} parent=1 // pred_check_branch
      %85 = sbr.rel (0) target = $region29
    $region28: #{tpu_custom_call.1} parent=1 // pred_region
      _
    $region29: #{tpu_custom_call.1} parent=1 // pred_fallthru
      _
    // Predicated region
    $region30: #{tpu_custom_call.1} parent=1 // pred_check
      _
    $region31: #{tpu_custom_call.1} parent=1 // pred_check_branch
      %87 = sbr.rel (0) target = $region33
    $region32: #{tpu_custom_call.1} parent=1 // pred_region
      %89 = vsyncadd [#allocation13], 0
      %s90 = sshll.u32 %s7, 4
      %s91 = int_to_ptr.hbm [resolvable:$true] %s90
      %s92 = sshll.u32 [#allocation12], 4
      %s93 = int_to_ptr.vmem [resolvable:$true] %s92
      %98 = dma.hbm_to_vmem [thread:$0]  %s91, 2048, %s93, [#allocation13], 128, 128, 8
    $region33: #{tpu_custom_call.1} parent=1 // pred_fallthru
      _
    // Predicated region
    $region34: #{tpu_custom_call.1} parent=1 // pred_check
      _
    $region35: #{tpu_custom_call.1} parent=1 // pred_check_branch
      %100 = sbr.rel (0) target = $region37
    $region36: #{tpu_custom_call.1} parent=1 // pred_region
      _
    $region37: #{tpu_custom_call.1} parent=1 // pred_fallthru
      _
    // Predicated region
    $region38: #{tpu_custom_call.1} parent=1 // pred_check
      _
    $region39: #{tpu_custom_call.1} parent=1 // pred_check_branch
      %102 = sbr.rel (0) target = $region41
    $region40: #{tpu_custom_call.1} parent=1 // pred_region
      %104 = dma.done [#allocation4], 768
    $region41: #{tpu_custom_call.1} parent=1 // pred_fallthru
      _
    // Predicated region
    $region42: #{tpu_custom_call.1} parent=1 // pred_check
      _
    $region43: #{tpu_custom_call.1} parent=1 // pred_check_branch
      %106 = sbr.rel (0) target = $region45
    $region44: #{tpu_custom_call.1} parent=1 // pred_region
      %108 = dma.done [#allocation7], 128
    $region45: #{tpu_custom_call.1} parent=1 // pred_fallthru
      _
    // Predicated region
    $region46: #{tpu_custom_call.1} parent=1 // pred_check
      _
    $region47: #{tpu_custom_call.1} parent=1 // pred_check_branch
      %110 = sbr.rel (0) target = $region49
    $region48: #{tpu_custom_call.1} parent=1 // pred_region
      %112 = dma.done [#allocation7], 1536
    $region49: #{tpu_custom_call.1} parent=1 // pred_fallthru
      _
    // Predicated region
    $region50: #{tpu_custom_call.1} parent=1 // pred_check
      _
    $region51: #{tpu_custom_call.1} parent=1 // pred_check_branch
      %114 = sbr.rel (0) target = $region53
    $region52: #{tpu_custom_call.1} parent=1 // pred_region
      %116 = dma.done [#allocation10], 8192
    $region53: #{tpu_custom_call.1} parent=1 // pred_fallthru
      _
    // Predicated region
    $region54: #{tpu_custom_call.1} parent=1 // pred_check
      _
    $region55: #{tpu_custom_call.1} parent=1 // pred_check_branch
      %118 = sbr.rel (0) target = $region57
    $region56: #{tpu_custom_call.1} parent=1 // pred_region
      %120 = dma.done [#allocation10], 2048
    $region57: #{tpu_custom_call.1} parent=1 // pred_fallthru
      _
    // Predicated region
    $region58: #{tpu_custom_call.1} parent=1 // pred_check
      _
    $region59: #{tpu_custom_call.1} parent=1 // pred_check_branch
      %122 = sbr.rel (0) target = $region61
    $region60: #{tpu_custom_call.1} parent=1 // pred_region
      %124 = dma.done [#allocation13], 2048
    $region61: #{tpu_custom_call.1} parent=1 // pred_fallthru
      _
    %p125 = scmp.eq.s32.totalorder 0, 0
    // Predicated region
    $region62: #{tpu_custom_call.1} parent=1 // pred_check
      %p126 = pneg %p125
    $region63: #{tpu_custom_call.1} parent=1 // pred_check_branch
      %128 = sbr.rel (%p126) target = $region65
    $region64: #{tpu_custom_call.1} parent=1 // pred_region
      %vm129 = vcmask 7168
      %130 = vst.msk [vmem:[#allocation2] sm:$0xff] %vm129, 0.0
      %131 = vst.msk [vmem:[#allocation2 + $0x8] sm:$0xff] %vm129, 0.0
      %132 = vst.msk [vmem:[#allocation2 + $0x10] sm:$0xff] %vm129, 0.0
    $region65: #{tpu_custom_call.1} parent=1 // pred_fallthru
      _
    %v133 = vld [vmem:[#allocation2] sm:$0xff]
    %v134 = vld [vmem:[#allocation2 + $0x8] sm:$0xff]
    %v135 = vld [vmem:[#allocation2 + $0x10] sm:$0xff]
    %v136 = vld [vmem:[#allocation3] sm:$0xff]
    %v137 = vld [vmem:[#allocation3 + $0x8] sm:$0xff]
    %v138 = vld [vmem:[#allocation3 + $0x10] sm:$0xff]
    %v139 = vld [vmem:[#allocation3 + $0x18] sm:$0xff]
    %v140 = vld [vmem:[#allocation3 + $0x20] sm:$0xff]
    %v141 = vld [vmem:[#allocation3 + $0x28] sm:$0xff]
    %v142 = vadd.f32 %v136, %v137
    %143 = vadd.xlane.f32.xlu0 %v142
    %v144 = vpop.xlane.xlu0 %143
    %v145 = vadd.f32 %v138, %v139
    %146 = vadd.xlane.f32.xlu0 %v145
    %v147 = vpop.xlane.xlu0 %146
    %v148 = vadd.f32 %v140, %v141
    %149 = vadd.xlane.f32.xlu0 %v148
    %v150 = vpop.xlane.xlu0 %149
    %v151 = vadd.f32 %v133, %v144
    %v152 = vadd.f32 %v134, %v147
    %v153 = vadd.f32 %v135, %v150
    %vm154 = vcmask 7168
    %155 = vst.msk [vmem:[#allocation2] sm:$0xff] %vm154, %v151
    %156 = vst.msk [vmem:[#allocation2 + $0x8] sm:$0xff] %vm154, %v152
    %157 = vst.msk [vmem:[#allocation2 + $0x10] sm:$0xff] %vm154, %v153
    // Predicated region
    $region66: #{tpu_custom_call.1} parent=1 // pred_check
      %p158 = pneg %p125
    $region67: #{tpu_custom_call.1} parent=1 // pred_check_branch
      %160 = sbr.rel (%p158) target = $region69
    $region68: #{tpu_custom_call.1} parent=1 // pred_region
      %v161 = vld [vmem:[#allocation2] sm:$0xff]
      %v162 = vld [vmem:[#allocation2 + $0x8] sm:$0xff]
      %v163 = vld [vmem:[#allocation2 + $0x10] sm:$0xff]
      %v164 = vld [vmem:[#allocation8] sm:$0xff]
      %v165 = vld [vmem:[#allocation8 + $0x8] sm:$0xff]
      %v166 = vld [vmem:[#allocation8 + $0x10] sm:$0xff]
      %v167 = vld [vmem:[#allocation8 + $0x18] sm:$0xff]
      %v168 = vld [vmem:[#allocation8 + $0x20] sm:$0xff]
      %v169 = vld [vmem:[#allocation8 + $0x28] sm:$0xff]
      %v170 = vld [vmem:[#allocation8 + $0x30] sm:$0xff]
      %v171 = vld [vmem:[#allocation8 + $0x38] sm:$0xff]
      %v172 = vld [vmem:[#allocation8 + $0x40] sm:$0xff]
      %v173 = vld [vmem:[#allocation8 + $0x48] sm:$0xff]
      %v174 = vld [vmem:[#allocation8 + $0x50] sm:$0xff]
      %v175 = vld [vmem:[#allocation8 + $0x58] sm:$0xff]
      %177 = vset.pattern.permute.xlu0 0
      %178 = vperm.xlu0 %177, %v161
      %v179 = vpop.permute.xlu0 %178
      %182 = vset.pattern.permute.xlu0 0
      %183 = vperm.xlu0 %182, %v162
      %v184 = vpop.permute.xlu0 %183
      %187 = vset.pattern.permute.xlu0 0
      %188 = vperm.xlu0 %187, %v163
      %v189 = vpop.permute.xlu0 %188
      %v191 = vmul.f32 %v179, %v164
      %v192 = vmul.f32 %v179, %v165
      %v193 = vmul.f32 %v179, %v166
      %v194 = vmul.f32 %v179, %v167
      %v195 = vmul.f32 %v184, %v168
      %v196 = vmul.f32 %v184, %v169
      %v197 = vmul.f32 %v184, %v170
      %v198 = vmul.f32 %v184, %v171
      %v199 = vmul.f32 %v189, %v172
      %v200 = vmul.f32 %v189, %v173
      %v201 = vmul.f32 %v189, %v174
      %v202 = vmul.f32 %v189, %v175
      %v203 = vld [vmem:[#allocation6] sm:$0xff]
      %vm204 = vcmask 195584
      %v206 = vsel %vm204, %v203, 0
      %208 = vmatpush.msra.mxu0 0.0
      %209 = vmatpush.msra.mxu0 0.0
      %210 = vmatpush.msra.mxu0 0.0
      %211 = vmatpush.msra.mxu0 0.0
      %212 = vmatpush.msra.mxu0 0.0
      %213 = vmatpush.msra.mxu0 0.0
      %214 = vmatpush.msra.mxu0 0.0
      %215 = vmatpush.msra.mxu0 0.0
      %216 = vmatpush.msra.mxu0 0.0
      %217 = vmatpush.msra.mxu0 0.0
      %218 = vmatpush.msra.mxu0 0.0
      %219 = vmatpush.msra.mxu0 0.0
      %220 = vmatpush.msra.mxu0 0.0
      %221 = vmatpush.msra.mxu0 %v199
      %222 = vmatpush.msra.mxu0 %v195
      %223 = vmatpush.msra.mxu0 %v191
      %224 = vmatmul.f32.gmra.mxu0 %v206
      %v225 = vpop.f32.mrf.mxu0
      %v226 = vadd.f32 0.0, %v225
      %227 = vdwg.mxu0
      %228 = vmatpush.msra.mxu0 0.0
      %229 = vmatpush.msra.mxu0 0.0
      %230 = vmatpush.msra.mxu0 0.0
      %231 = vmatpush.msra.mxu0 0.0
      %232 = vmatpush.msra.mxu0 0.0
      %233 = vmatpush.msra.mxu0 0.0
      %234 = vmatpush.msra.mxu0 0.0
      %235 = vmatpush.msra.mxu0 0.0
      %236 = vmatpush.msra.mxu0 0.0
      %237 = vmatpush.msra.mxu0 0.0
      %238 = vmatpush.msra.mxu0 0.0
      %239 = vmatpush.msra.mxu0 0.0
      %240 = vmatpush.msra.mxu0 0.0
      %241 = vmatpush.msra.mxu0 %v200
      %242 = vmatpush.msra.mxu0 %v196
      %243 = vmatpush.msra.mxu0 %v192
      %244 = vmatmul.f32.gmra.mxu0 %v206
      %v245 = vpop.f32.mrf.mxu0
      %v246 = vadd.f32 0.0, %v245
      %247 = vdwg.mxu0
      %248 = vmatpush.msra.mxu0 0.0
      %249 = vmatpush.msra.mxu0 0.0
      %250 = vmatpush.msra.mxu0 0.0
      %251 = vmatpush.msra.mxu0 0.0
      %252 = vmatpush.msra.mxu0 0.0
      %253 = vmatpush.msra.mxu0 0.0
      %254 = vmatpush.msra.mxu0 0.0
      %255 = vmatpush.msra.mxu0 0.0
      %256 = vmatpush.msra.mxu0 0.0
      %257 = vmatpush.msra.mxu0 0.0
      %258 = vmatpush.msra.mxu0 0.0
      %259 = vmatpush.msra.mxu0 0.0
      %260 = vmatpush.msra.mxu0 0.0
      %261 = vmatpush.msra.mxu0 %v201
      %262 = vmatpush.msra.mxu0 %v197
      %263 = vmatpush.msra.mxu0 %v193
      %264 = vmatmul.f32.gmra.mxu0 %v206
      %v265 = vpop.f32.mrf.mxu0
      %v266 = vadd.f32 0.0, %v265
      %267 = vdwg.mxu0
      %268 = vmatpush.msra.mxu0 0.0
      %269 = vmatpush.msra.mxu0 0.0
      %270 = vmatpush.msra.mxu0 0.0
      %271 = vmatpush.msra.mxu0 0.0
      %272 = vmatpush.msra.mxu0 0.0
      %273 = vmatpush.msra.mxu0 0.0
      %274 = vmatpush.msra.mxu0 0.0
      %275 = vmatpush.msra.mxu0 0.0
      %276 = vmatpush.msra.mxu0 0.0
      %277 = vmatpush.msra.mxu0 0.0
      %278 = vmatpush.msra.mxu0 0.0
      %279 = vmatpush.msra.mxu0 0.0
      %280 = vmatpush.msra.mxu0 0.0
      %281 = vmatpush.msra.mxu0 %v202
      %282 = vmatpush.msra.mxu0 %v198
      %283 = vmatpush.msra.mxu0 %v194
      %284 = vmatmul.f32.gmra.mxu0 %v206
      %v285 = vpop.f32.mrf.mxu0
      %v286 = vadd.f32 0.0, %v285
      %287 = vdwg.mxu0
      %v288 = vmul.f32 %v226, 0.00390625
      %v289 = vmul.f32 %v246, 0.00390625
      %v290 = vmul.f32 %v266, 0.00390625
      %v291 = vmul.f32 %v286, 0.00390625
      %v292 = vld [vmem:[#allocation9] sm:$0xff]
      %v293 = vld [vmem:[#allocation9 + $0x8] sm:$0xff]
      %v294 = vld [vmem:[#allocation9 + $0x10] sm:$0xff]
      %v295 = vld [vmem:[#allocation9 + $0x18] sm:$0xff]
      %v296 = vld [vmem:[#allocation9 + $0x20] sm:$0xff]
      %v297 = vld [vmem:[#allocation9 + $0x28] sm:$0xff]
      %v298 = vld [vmem:[#allocation9 + $0x30] sm:$0xff]
      %v299 = vld [vmem:[#allocation9 + $0x38] sm:$0xff]
      %v300 = vld [vmem:[#allocation9 + $0x40] sm:$0xff]
      %v301 = vld [vmem:[#allocation9 + $0x48] sm:$0xff]
      %v302 = vld [vmem:[#allocation9 + $0x50] sm:$0xff]
      %v303 = vld [vmem:[#allocation9 + $0x58] sm:$0xff]
      %v304 = vld [vmem:[#allocation9 + $0x60] sm:$0xff]
      %v305 = vld [vmem:[#allocation9 + $0x68] sm:$0xff]
      %v306 = vld [vmem:[#allocation9 + $0x70] sm:$0xff]
      %v307 = vld [vmem:[#allocation9 + $0x78] sm:$0xff]
      %v308 = vld [vmem:[#allocation9 + $0x80] sm:$0xff]
      %v309 = vld [vmem:[#allocation9 + $0x88] sm:$0xff]
      %v310 = vld [vmem:[#allocation9 + $0x90] sm:$0xff]
      %v311 = vld [vmem:[#allocation9 + $0x98] sm:$0xff]
      %v312 = vld [vmem:[#allocation9 + $0xa0] sm:$0xff]
      %v313 = vld [vmem:[#allocation9 + $0xa8] sm:$0xff]
      %v314 = vld [vmem:[#allocation9 + $0xb0] sm:$0xff]
      %v315 = vld [vmem:[#allocation9 + $0xb8] sm:$0xff]
      %v316 = vld [vmem:[#allocation9 + $0xc0] sm:$0xff]
      %v317 = vld [vmem:[#allocation9 + $0xc8] sm:$0xff]
      %v318 = vld [vmem:[#allocation9 + $0xd0] sm:$0xff]
      %v319 = vld [vmem:[#allocation9 + $0xd8] sm:$0xff]
      %v320 = vld [vmem:[#allocation9 + $0xe0] sm:$0xff]
      %v321 = vld [vmem:[#allocation9 + $0xe8] sm:$0xff]
      %v322 = vld [vmem:[#allocation9 + $0xf0] sm:$0xff]
      %v323 = vld [vmem:[#allocation9 + $0xf8] sm:$0xff]
      %v324 = vld [vmem:[#allocation9 + $0x100] sm:$0xff]
      %v325 = vld [vmem:[#allocation9 + $0x108] sm:$0xff]
      %v326 = vld [vmem:[#allocation9 + $0x110] sm:$0xff]
      %v327 = vld [vmem:[#allocation9 + $0x118] sm:$0xff]
      %v328 = vld [vmem:[#allocation9 + $0x120] sm:$0xff]
      %v329 = vld [vmem:[#allocation9 + $0x128] sm:$0xff]
      %v330 = vld [vmem:[#allocation9 + $0x130] sm:$0xff]
      %v331 = vld [vmem:[#allocation9 + $0x138] sm:$0xff]
      %v332 = vld [vmem:[#allocation9 + $0x140] sm:$0xff]
      %v333 = vld [vmem:[#allocation9 + $0x148] sm:$0xff]
      %v334 = vld [vmem:[#allocation9 + $0x150] sm:$0xff]
      %v335 = vld [vmem:[#allocation9 + $0x158] sm:$0xff]
      %v336 = vld [vmem:[#allocation9 + $0x160] sm:$0xff]
      %v337 = vld [vmem:[#allocation9 + $0x168] sm:$0xff]
      %v338 = vld [vmem:[#allocation9 + $0x170] sm:$0xff]
      %v339 = vld [vmem:[#allocation9 + $0x178] sm:$0xff]
      %v340 = vld [vmem:[#allocation9 + $0x180] sm:$0xff]
      %v341 = vld [vmem:[#allocation9 + $0x188] sm:$0xff]
      %v342 = vld [vmem:[#allocation9 + $0x190] sm:$0xff]
      %v343 = vld [vmem:[#allocation9 + $0x198] sm:$0xff]
      %v344 = vld [vmem:[#allocation9 + $0x1a0] sm:$0xff]
      %v345 = vld [vmem:[#allocation9 + $0x1a8] sm:$0xff]
      %v346 = vld [vmem:[#allocation9 + $0x1b0] sm:$0xff]
      %v347 = vld [vmem:[#allocation9 + $0x1b8] sm:$0xff]
      %v348 = vld [vmem:[#allocation9 + $0x1c0] sm:$0xff]
      %v349 = vld [vmem:[#allocation9 + $0x1c8] sm:$0xff]
      %v350 = vld [vmem:[#allocation9 + $0x1d0] sm:$0xff]
      %v351 = vld [vmem:[#allocation9 + $0x1d8] sm:$0xff]
      %v352 = vld [vmem:[#allocation9 + $0x1e0] sm:$0xff]
      %v353 = vld [vmem:[#allocation9 + $0x1e8] sm:$0xff]
      %v354 = vld [vmem:[#allocation9 + $0x1f0] sm:$0xff]
      %v355 = vld [vmem:[#allocation9 + $0x1f8] sm:$0xff]
      %v356 = vld [vmem:[%s4] sm:$0x1]
      %v358 = vperm.slane %v356, 0
      %360 = vmatpush.msra.mxu0 %v307
      %361 = vmatpush.msra.mxu0 %v306
      %362 = vmatpush.msra.mxu0 %v305
      %363 = vmatpush.msra.mxu0 %v304
      %364 = vmatpush.msra.mxu0 %v303
      %365 = vmatpush.msra.mxu0 %v302
      %366 = vmatpush.msra.mxu0 %v301
      %367 = vmatpush.msra.mxu0 %v300
      %368 = vmatpush.msra.mxu0 %v299
      %369 = vmatpush.msra.mxu0 %v298
      %370 = vmatpush.msra.mxu0 %v297
      %371 = vmatpush.msra.mxu0 %v296
      %372 = vmatpush.msra.mxu0 %v295
      %373 = vmatpush.msra.mxu0 %v294
      %374 = vmatpush.msra.mxu0 %v293
      %375 = vmatpush.msra.mxu0 %v292
      %376 = vmatmul.f32.gmra.mxu0 %v288
      %v377 = vpop.f32.mrf.mxu0
      %v378 = vadd.f32 %v358, %v377
      %379 = vdwg.mxu0
      %380 = vmatpush.msra.mxu0 %v323
      %381 = vmatpush.msra.mxu0 %v322
      %382 = vmatpush.msra.mxu0 %v321
      %383 = vmatpush.msra.mxu0 %v320
      %384 = vmatpush.msra.mxu0 %v319
      %385 = vmatpush.msra.mxu0 %v318
      %386 = vmatpush.msra.mxu0 %v317
      %387 = vmatpush.msra.mxu0 %v316
      %388 = vmatpush.msra.mxu0 %v315
      %389 = vmatpush.msra.mxu0 %v314
      %390 = vmatpush.msra.mxu0 %v313
      %391 = vmatpush.msra.mxu0 %v312
      %392 = vmatpush.msra.mxu0 %v311
      %393 = vmatpush.msra.mxu0 %v310
      %394 = vmatpush.msra.mxu0 %v309
      %395 = vmatpush.msra.mxu0 %v308
      %396 = vmatmul.f32.gmra.mxu0 %v289
      %v397 = vpop.f32.mrf.mxu0
      %v398 = vadd.f32 %v378, %v397
      %399 = vdwg.mxu0
      %400 = vmatpush.msra.mxu0 %v339
      %401 = vmatpush.msra.mxu0 %v338
      %402 = vmatpush.msra.mxu0 %v337
      %403 = vmatpush.msra.mxu0 %v336
      %404 = vmatpush.msra.mxu0 %v335
      %405 = vmatpush.msra.mxu0 %v334
      %406 = vmatpush.msra.mxu0 %v333
      %407 = vmatpush.msra.mxu0 %v332
      %408 = vmatpush.msra.mxu0 %v331
      %409 = vmatpush.msra.mxu0 %v330
      %410 = vmatpush.msra.mxu0 %v329
      %411 = vmatpush.msra.mxu0 %v328
      %412 = vmatpush.msra.mxu0 %v327
      %413 = vmatpush.msra.mxu0 %v326
      %414 = vmatpush.msra.mxu0 %v325
      %415 = vmatpush.msra.mxu0 %v324
      %416 = vmatmul.f32.gmra.mxu0 %v290
      %v417 = vpop.f32.mrf.mxu0
      %v418 = vadd.f32 %v398, %v417
      %419 = vdwg.mxu0
      %420 = vmatpush.msra.mxu0 %v355
      %421 = vmatpush.msra.mxu0 %v354
      %422 = vmatpush.msra.mxu0 %v353
      %423 = vmatpush.msra.mxu0 %v352
      %424 = vmatpush.msra.mxu0 %v351
      %425 = vmatpush.msra.mxu0 %v350
      %426 = vmatpush.msra.mxu0 %v349
      %427 = vmatpush.msra.mxu0 %v348
      %428 = vmatpush.msra.mxu0 %v347
      %429 = vmatpush.msra.mxu0 %v346
      %430 = vmatpush.msra.mxu0 %v345
      %431 = vmatpush.msra.mxu0 %v344
      %432 = vmatpush.msra.mxu0 %v343
      %433 = vmatpush.msra.mxu0 %v342
      %434 = vmatpush.msra.mxu0 %v341
      %435 = vmatpush.msra.mxu0 %v340
      %436 = vmatmul.f32.gmra.mxu0 %v291
      %v437 = vpop.f32.mrf.mxu0
      %v438 = vadd.f32 %v418, %v437
      %439 = vdwg.mxu0
      %v440 = vmax.f32 %v438, 0.0
      %v441 = vld [vmem:[#allocation11] sm:$0xff]
      %v442 = vld [vmem:[#allocation11 + $0x8] sm:$0xff]
      %v443 = vld [vmem:[#allocation11 + $0x10] sm:$0xff]
      %v444 = vld [vmem:[#allocation11 + $0x18] sm:$0xff]
      %v445 = vld [vmem:[#allocation11 + $0x20] sm:$0xff]
      %v446 = vld [vmem:[#allocation11 + $0x28] sm:$0xff]
      %v447 = vld [vmem:[#allocation11 + $0x30] sm:$0xff]
      %v448 = vld [vmem:[#allocation11 + $0x38] sm:$0xff]
      %v449 = vld [vmem:[#allocation11 + $0x40] sm:$0xff]
      %v450 = vld [vmem:[#allocation11 + $0x48] sm:$0xff]
      %v451 = vld [vmem:[#allocation11 + $0x50] sm:$0xff]
      %v452 = vld [vmem:[#allocation11 + $0x58] sm:$0xff]
      %v453 = vld [vmem:[#allocation11 + $0x60] sm:$0xff]
      %v454 = vld [vmem:[#allocation11 + $0x68] sm:$0xff]
      %v455 = vld [vmem:[#allocation11 + $0x70] sm:$0xff]
      %v456 = vld [vmem:[#allocation11 + $0x78] sm:$0xff]
      %v457 = vld [vmem:[%s6] sm:$0x1]
      %v459 = vperm.slane %v457, 0
      %461 = vmatpush.msra.mxu0 %v456
      %462 = vmatpush.msra.mxu0 %v455
      %463 = vmatpush.msra.mxu0 %v454
      %464 = vmatpush.msra.mxu0 %v453
      %465 = vmatpush.msra.mxu0 %v452
      %466 = vmatpush.msra.mxu0 %v451
      %467 = vmatpush.msra.mxu0 %v450
      %468 = vmatpush.msra.mxu0 %v449
      %469 = vmatpush.msra.mxu0 %v448
      %470 = vmatpush.msra.mxu0 %v447
      %471 = vmatpush.msra.mxu0 %v446
      %472 = vmatpush.msra.mxu0 %v445
      %473 = vmatpush.msra.mxu0 %v444
      %474 = vmatpush.msra.mxu0 %v443
      %475 = vmatpush.msra.mxu0 %v442
      %476 = vmatpush.msra.mxu0 %v441
      %477 = vmatmul.f32.gmra.mxu0 %v440
      %v478 = vpop.f32.mrf.mxu0
      %v479 = vadd.f32 %v459, %v478
      %480 = vdwg.mxu0
      %v481 = vmax.f32 %v479, 0.0
      %v482 = vld [vmem:[#allocation12] sm:$0xff]
      %v483 = vld [vmem:[#allocation12 + $0x8] sm:$0xff]
      %v484 = vld [vmem:[#allocation12 + $0x10] sm:$0xff]
      %v485 = vld [vmem:[#allocation12 + $0x18] sm:$0xff]
      %v486 = vld [vmem:[#allocation12 + $0x20] sm:$0xff]
      %v487 = vld [vmem:[#allocation12 + $0x28] sm:$0xff]
      %v488 = vld [vmem:[#allocation12 + $0x30] sm:$0xff]
      %v489 = vld [vmem:[#allocation12 + $0x38] sm:$0xff]
      %v490 = vld [vmem:[#allocation12 + $0x40] sm:$0xff]
      %v491 = vld [vmem:[#allocation12 + $0x48] sm:$0xff]
      %v492 = vld [vmem:[#allocation12 + $0x50] sm:$0xff]
      %v493 = vld [vmem:[#allocation12 + $0x58] sm:$0xff]
      %v494 = vld [vmem:[#allocation12 + $0x60] sm:$0xff]
      %v495 = vld [vmem:[#allocation12 + $0x68] sm:$0xff]
      %v496 = vld [vmem:[#allocation12 + $0x70] sm:$0xff]
      %v497 = vld [vmem:[#allocation12 + $0x78] sm:$0xff]
      %v498 = vld [vmem:[%s8] sm:$0x1]
      %v500 = vperm.slane %v498, 0
      %502 = vmatpush.msra.mxu0 %v497
      %503 = vmatpush.msra.mxu0 %v496
      %504 = vmatpush.msra.mxu0 %v495
      %505 = vmatpush.msra.mxu0 %v494
      %506 = vmatpush.msra.mxu0 %v493
      %507 = vmatpush.msra.mxu0 %v492
      %508 = vmatpush.msra.mxu0 %v491
      %509 = vmatpush.msra.mxu0 %v490
      %510 = vmatpush.msra.mxu0 %v489
      %511 = vmatpush.msra.mxu0 %v488
      %512 = vmatpush.msra.mxu0 %v487
      %513 = vmatpush.msra.mxu0 %v486
      %514 = vmatpush.msra.mxu0 %v485
      %515 = vmatpush.msra.mxu0 %v484
      %516 = vmatpush.msra.mxu0 %v483
      %517 = vmatpush.msra.mxu0 %v482
      %518 = vmatmul.f32.gmra.mxu0 %v481
      %v519 = vpop.f32.mrf.mxu0
      %v520 = vadd.f32 %v500, %v519
      %521 = vdwg.mxu0
      %522 = vst [vmem:[#allocation14] sm:$0xff] %v520
    $region69: #{tpu_custom_call.1} parent=1 // pred_fallthru
      _
    // Predicated region
    $region70: #{tpu_custom_call.1} parent=1 // pred_check
      _
    $region71: #{tpu_custom_call.1} parent=1 // pred_check_branch
      %524 = sbr.rel (0) target = $region73
    $region72: #{tpu_custom_call.1} parent=1 // pred_region
      %526 = vsyncadd [#allocation5], 0
      %s528 = sshll.u32 [#allocation14], 4
      %s529 = int_to_ptr.vmem [resolvable:$true] %s528
      %s530 = sshll.u32 %s9, 4
      %s531 = int_to_ptr.hbm [resolvable:$true] %s530
      %533 = dma.vmem_to_hbm [thread:$0]  %s529, 128, %s531, [#allocation5]
    $region73: #{tpu_custom_call.1} parent=1 // pred_fallthru
      _
    // Predicated region
    $region74: #{tpu_custom_call.1} parent=1 // pred_check
      _
    $region75: #{tpu_custom_call.1} parent=1 // pred_check_branch
      %535 = sbr.rel (0) target = $region77
    $region76: #{tpu_custom_call.1} parent=1 // pred_region
      %537 = dma.done [#allocation5], 128
    $region77: #{tpu_custom_call.1} parent=1 // pred_fallthru
      _
    %538 = vsyncpa [#allocation4], 1
    %539 = vsyncpa [#allocation7], 1
    %540 = vsyncpa [#allocation10], 1
    %541 = vsyncpa [#allocation13], 1
    %542 = vsyncpa [#allocation5], 1

</llo_original>
